<compile_context>
chip_gen: v5e
topology: v5e:2x2
jax: 0.10.0
libtpu: 0.0.40
codegen_flags: <defaults>
</compile_context>

<pallas_src>
import functools

import jax
import jax.numpy as jnp
from jax import lax
from jax.experimental import pallas as pl
from jax.experimental.pallas import tpu as pltpu

_LANES = 128


def _round_up(x, m):
    return ((x + m - 1) // m) * m


def _sublane_granule(dtype):
    # f32 -> 8, bf16/f16 -> 16, int8/fp8 -> 32 sublane packing.
    return max(8, 32 // dtype.itemsize)


def _sse_partial_kernel(pred_ref, tgt_ref, part_ref, *, valid_rows, tm, cols):
    """Per-tile partial sum of squared differences.

    pred_ref/tgt_ref: (tm, cols) tiles in their native dtype (cast to f32 here
                      so HBM reads stay at the narrow width).
    part_ref:         (8, cols) per-tile partial (whole-vreg VPU adds).
    """
    diff = pred_ref[...].astype(jnp.float32) - tgt_ref[...].astype(jnp.float32)
    sq = diff * diff                                     # (tm, cols) VPU

    # Static gate: only the last block can overrun the array; if the grid tiles
    # the rows exactly, no masking code is emitted at all.
    if valid_rows % tm:
        limit = valid_rows - pl.program_id(0) * tm       # >= tm on interior tiles
        row_ids = lax.broadcasted_iota(jnp.int32, sq.shape, 0)
        sq = jnp.where(row_ids < limit, sq, 0.0)         # mask BEFORE summing

    # Tiny single-block case only (tm < 8 / not a multiple of 8): pad rows so the
    # vreg-aligned reduction below is uniform.  Never triggers on large inputs.
    if tm % 8:
        pad_rows = (-tm) % 8
        sq = jnp.concatenate([sq, jnp.zeros((pad_rows, cols), jnp.float32)], axis=0)

    # (k, 8, cols) -> sum over k: elementwise adds of whole vregs, no XLU.
    part_ref[...] = jnp.sum(sq.reshape(-1, 8, cols), axis=0)


def xor_loss(output, target, w, weight_decay, *, target_tile_bytes=2 << 20):
    """Pallas equivalent of xor.forward(output, target, w)."""
    n, d = output.shape
    assert target.shape == (n, d)
    total = n * d

    # ---- zero-copy layout selection -----------------------------------------
    if total % _LANES == 0:
        rows, cols = total // _LANES, _LANES
        pred2 = output.reshape(rows, cols)   # contiguous re-view: no HBM copy
        tgt2 = target.reshape(rows, cols)
    else:
        rows, cols = n, d                    # natural layout: no copy at all
        pred2, tgt2 = output, target

    # ---- balanced tile selection ---------------------------------------------
    sub = max(_sublane_granule(pred2.dtype), _sublane_granule(tgt2.dtype))
    if rows <= sub:
        tm, num_tiles = rows, 1              # one full-extent block (always legal)
    else:
        itemsize = max(pred2.dtype.itemsize, tgt2.dtype.itemsize)
        bytes_per_row = _round_up(cols, _LANES) * itemsize     # VMEM row footprint
        cap = max(sub, (target_tile_bytes // bytes_per_row) // sub * sub)
        rows_g = _round_up(rows, sub)
        num_tiles = pl.cdiv(rows_g, cap)
        if num_tiles == 1 and rows_g >= 2 * sub:
            num_tiles = 2                    # v7x: give both TensorCores a tile
        tm = min(rows_g, _round_up(pl.cdiv(rows_g, num_tiles), sub))
        num_tiles = pl.cdiv(rows_g, tm)

    kernel = functools.partial(_sse_partial_kernel,
                               valid_rows=rows, tm=tm, cols=cols)

    cost = pl.CostEstimate(
        flops=3 * total,
        transcendentals=0,
        bytes_accessed=total * (pred2.dtype.itemsize + tgt2.dtype.itemsize)
        + num_tiles * 8 * cols * 4,
    )

    partials = pl.pallas_call(
        kernel,
        out_shape=jax.ShapeDtypeStruct((num_tiles * 8, cols), jnp.float32),
        grid_spec=pltpu.PrefetchScalarGridSpec(
            num_scalar_prefetch=0,
            grid=(num_tiles,),
            in_specs=[
                pl.BlockSpec((tm, cols), lambda i: (i, 0)),   # network output tile
                pl.BlockSpec((tm, cols), lambda i: (i, 0)),   # target tile
            ],
            out_specs=pl.BlockSpec((8, cols), lambda i: (i, 0)),
        ),
        compiler_params=pltpu.CompilerParams(
            # tiles are independent -> parallel grid (shards across TCs on v7x)
            dimension_semantics=("parallel",),
        ),
        cost_estimate=cost,
    )(pred2, tgt2)

    # Tiny final reductions + weight-decay penalty stay in plain JAX.
    sse = jnp.sum(partials)
    penalty = (jnp.sum((w.astype(jnp.float32) - jnp.float32(1.0 / d)) ** 2)
               * jnp.float32(weight_decay))
    return sse / jnp.float32(n) + penalty


def xor_loss_ref(output, target, w, weight_decay):
    output = output.astype(jnp.float32)
    target = target.astype(jnp.float32)
    w = w.astype(jnp.float32)
    diff = jnp.mean(jnp.sum((output - target) ** 2, axis=1))
    diff += jnp.sum((w - 1.0 / target.shape[1]) ** 2) * weight_decay
    return diff


if __name__ == "__main__":
    key = jax.random.PRNGKey(0)
    keys = jax.random.split(key, 12)
    weight_decay = 0.01

    # --- case 1: small [batch, features], lane-dense path, single tiny block ---
    N, D = 16, 32
    out1 = jax.random.normal(keys[0], (N, D), dtype=jnp.float32)
    tgt1 = (jax.random.uniform(keys[1], (N, D)) > 0.5).astype(jnp.float32)
    w1 = jax.random.normal(keys[2], (32, 32), dtype=jnp.float32) * 0.1
    loss1 = jax.block_until_ready(xor_loss(out1, tgt1, w1, weight_decay))
    ref1 = xor_loss_ref(out1, tgt1, w1, weight_decay)
    assert jnp.allclose(loss1, ref1, rtol=1e-5, atol=1e-5), (loss1, ref1)

    # --- case 2: lane-dense path, many tiles + ragged last tile (row masking) ---
    N2, D2 = 64, 100                      # total = 6400 = 50 * 128
    out2 = jax.random.normal(keys[3], (N2, D2), dtype=jnp.float32)
    tgt2 = (jax.random.uniform(keys[4], (N2, D2)) > 0.5).astype(jnp.float32)
    w2 = jax.random.normal(keys[5], (48, 64), dtype=jnp.float32) * 0.1
    loss2 = jax.block_until_ready(
        xor_loss(out2, tgt2, w2, weight_decay, target_tile_bytes=4096))
    ref2 = xor_loss_ref(out2, tgt2, w2, weight_decay)
    assert jnp.allclose(loss2, ref2, rtol=1e-5, atol=1e-5), (loss2, ref2)

    # --- case 3: natural (N, D) path (total not a lane multiple), 2 tiles -------
    N3, D3 = 24, 100                      # total = 2400, 2400 % 128 != 0
    out3 = jax.random.normal(keys[6], (N3, D3), dtype=jnp.float32)
    tgt3 = (jax.random.uniform(keys[7], (N3, D3)) > 0.5).astype(jnp.float32)
    w3 = jax.random.normal(keys[8], (16, 100), dtype=jnp.float32) * 0.1
    loss3 = jax.block_until_ready(xor_loss(out3, tgt3, w3, weight_decay))
    ref3 = xor_loss_ref(out3, tgt3, w3, weight_decay)
    assert jnp.allclose(loss3, ref3, rtol=1e-5, atol=1e-5), (loss3, ref3)

    # --- case 4: native bf16 inputs (no wrapper cast; kernel upcasts to f32) ----
    N4, D4 = 32, 64
    out4 = jax.random.normal(keys[9], (N4, D4), dtype=jnp.bfloat16)
    tgt4 = (jax.random.uniform(keys[10], (N4, D4)) > 0.5).astype(jnp.bfloat16)
    w4 = jax.random.normal(keys[11], (32, 64), dtype=jnp.float32) * 0.1
    loss4 = jax.block_until_ready(xor_loss(out4, tgt4, w4, weight_decay))
    ref4 = xor_loss_ref(out4, tgt4, w4, weight_decay)
    assert jnp.allclose(loss4, ref4, rtol=1e-4, atol=1e-4), (loss4, ref4)

    print("KERNEL_OK")
</pallas_src>

<mosaic_0001>
module attributes {stable_mosaic.version = 11 : i64} {
  func.func @_sse_partial_kernel(%arg0: i32, %arg1: memref<4x128xf32, #tpu.memory_space<vmem>>, %arg2: memref<4x128xf32, #tpu.memory_space<vmem>>, %arg3: memref<8x128xf32, #tpu.memory_space<vmem>>) attributes {dimension_semantics = [#tpu.dimension_semantics<parallel>], iteration_bounds = array<i64: 1>, scalar_prefetch = 0 : i64, scratch_operands = 0 : i64, tpu.core_type = #tpu.core_type<tc>, window_params = [{transform_indices = @transform_0, window_bounds = array<i64: 4, 128>}, {transform_indices = @transform_1, window_bounds = array<i64: 4, 128>}, {transform_indices = @transform_2, window_bounds = array<i64: 8, 128>}]} {
    %c0 = arith.constant 0 : index
    %c0_0 = arith.constant 0 : index
    %0 = vector.load %arg1[%c0, %c0_0] : memref<4x128xf32, #tpu.memory_space<vmem>>, vector<4x128xf32>
    %c0_1 = arith.constant 0 : index
    %c0_2 = arith.constant 0 : index
    %1 = vector.load %arg2[%c0_1, %c0_2] : memref<4x128xf32, #tpu.memory_space<vmem>>, vector<4x128xf32>
    %2 = arith.subf %0, %1 : vector<4x128xf32>
    %3 = arith.mulf %2, %2 : vector<4x128xf32>
    %cst = arith.constant 0.000000e+00 : f32
    %4 = vector.broadcast %cst : f32 to vector<4x128xf32>
    %5 = tpu.concatenate %3, %4 in 0 : vector<4x128xf32>, vector<4x128xf32> -> vector<8x128xf32>
    %6 = vector.shape_cast %5 : vector<8x128xf32> to vector<1x8x128xf32>
    %cst_3 = arith.constant dense<0.000000e+00> : vector<8x128xf32>
    %7 = vector.multi_reduction <add>, %6, %cst_3 [0] : vector<1x8x128xf32> to vector<8x128xf32>
    %c0_4 = arith.constant 0 : index
    %c0_5 = arith.constant 0 : index
    %8 = vector.load %arg3[%c0_4, %c0_5] : memref<8x128xf32, #tpu.memory_space<vmem>>, vector<8x128xf32>
    tpu.vector_store %arg3[%c0_4, %c0_5], %7 {strides = array<i32>} : memref<8x128xf32, #tpu.memory_space<vmem>>, vector<8x128xf32>,
    return
  }
  func.func @transform_0(%arg0: i32) -> (i32, i32) {
    %c0_i32 = arith.constant 0 : i32
    %c0_i32_0 = arith.constant 0 : i32
    return %arg0, %c0_i32 : i32, i32
  }
  func.func @transform_1(%arg0: i32) -> (i32, i32) {
    %c0_i32 = arith.constant 0 : i32
    %c0_i32_0 = arith.constant 0 : i32
    return %arg0, %c0_i32 : i32, i32
  }
  func.func @transform_2(%arg0: i32) -> (i32, i32) {
    %c0_i32 = arith.constant 0 : i32
    %c0_i32_0 = arith.constant 0 : i32
    return %arg0, %c0_i32 : i32, i32
  }
}

</mosaic_0001>

<llo_original>
// kernel: tpu_custom_call.1
$region0: #{tpu_custom_call.1}
  #allocation0 [shape = 'u32[]', space=smem, size = 0x4, offset = 0x4, fixed_abs, tag = 'smem constant byte address 0x4 - core index']
  #allocation1 [shape = 'u32[72,128]{1,0:T(1,128)}', space=vmem, size = 0x9000, scoped, tag = 'internal scratch']
  %s0 = inlined_call_operand.hbm [shape: f32[4,128], index: 0, kind: input, shape index: {}]
  %s1 = inlined_call_operand.hbm [shape: f32[4,128], index: 1, kind: input, shape index: {}]
  %s2 = inlined_call_operand.hbm [shape: f32[8,128], index: 2, kind: output, shape index: {}]
  %s3 = sld [smem:[#allocation0]]
  $region26: #{tpu_custom_call.1} parent=0
    _
  %s5 = ssub.s32 1, %s3
  %s6 = scalar_select 0, %s5, %s3
  $region1: #{tpu_custom_call.1} parent=0
    #allocation2 [shape = 'u8[2048]{0}', space=vmem, size = 0x800, scoped, tag = 'input window, operand 0, single buffered']
    #allocation3 [shape = 's32[1]{0}', space=sflag, size = 0x4, scoped, tag = 'scoped memory for tpu_custom_call.1']
    #allocation4 [shape = 's32[1]{0}', space=sflag, size = 0x4, scoped, tag = 'scoped memory for tpu_custom_call.1']
    #allocation5 [shape = 'u8[2048]{0}', space=vmem, size = 0x800, scoped, tag = 'input window, operand 1, single buffered']
    #allocation6 [shape = 's32[1]{0}', space=sflag, size = 0x4, scoped, tag = 'scoped memory for tpu_custom_call.1']
    #allocation7 [shape = 'u8[4096]{0}', space=vmem, size = 0x1000, scoped, tag = 'output window, operand 0, single buffered']
    %7 = vsyncpa [#allocation3], 0
    %8 = vsyncpa [#allocation6], 0
    %9 = vsyncpa [#allocation4], 0
    // Predicated region
    $region2: #{tpu_custom_call.1} parent=1 // pred_check
      _
    $region3: #{tpu_custom_call.1} parent=1 // pred_check_branch
      %11 = sbr.rel (0) target = $region5
    $region4: #{tpu_custom_call.1} parent=1 // pred_region
      %13 = vsyncadd [#allocation3], 0
      %s15 = sshll.u32 %s0, 4
      %s16 = int_to_ptr.hbm [resolvable:$true] %s15
      %s17 = sshll.u32 [#allocation2], 4
      %s18 = int_to_ptr.vmem [resolvable:$true] %s17
      %20 = dma.hbm_to_vmem [thread:$0]  %s16, 64, %s18, [#allocation3]
    $region5: #{tpu_custom_call.1} parent=1 // pred_fallthru
      _
    // Predicated region
    $region6: #{tpu_custom_call.1} parent=1 // pred_check
      _
    $region7: #{tpu_custom_call.1} parent=1 // pred_check_branch
      %22 = sbr.rel (0) target = $region9
    $region8: #{tpu_custom_call.1} parent=1 // pred_region
      %24 = vsyncadd [#allocation6], 0
      %s26 = sshll.u32 %s1, 4
      %s27 = int_to_ptr.hbm [resolvable:$true] %s26
      %s28 = sshll.u32 [#allocation5], 4
      %s29 = int_to_ptr.vmem [resolvable:$true] %s28
      %31 = dma.hbm_to_vmem [thread:$0]  %s27, 64, %s29, [#allocation6]
    $region9: #{tpu_custom_call.1} parent=1 // pred_fallthru
      _
    // Predicated region
    $region10: #{tpu_custom_call.1} parent=1 // pred_check
      _
    $region11: #{tpu_custom_call.1} parent=1 // pred_check_branch
      %33 = sbr.rel (0) target = $region13
    $region12: #{tpu_custom_call.1} parent=1 // pred_region
      %35 = dma.done [#allocation3], 64
    $region13: #{tpu_custom_call.1} parent=1 // pred_fallthru
      _
    // Predicated region
    $region14: #{tpu_custom_call.1} parent=1 // pred_check
      _
    $region15: #{tpu_custom_call.1} parent=1 // pred_check_branch
      %37 = sbr.rel (0) target = $region17
    $region16: #{tpu_custom_call.1} parent=1 // pred_region
      %39 = dma.done [#allocation6], 64
    $region17: #{tpu_custom_call.1} parent=1 // pred_fallthru
      _
    %v40 = vld [vmem:[#allocation2] sm:$0xf]
    %v41 = vld [vmem:[#allocation5] sm:$0xf]
    %v42 = vsub.f32 %v40, %v41
    %v43 = vmul.f32 %v42, %v42
    %vm44 = vcmask 1043456
    %v45 = vsel %vm44, %v43, 0.0
    %v46 = vadd.f32 %v45, 0.0
    %47 = vst [vmem:[#allocation7] sm:$0xff] %v46
    // Predicated region
    $region18: #{tpu_custom_call.1} parent=1 // pred_check
      _
    $region19: #{tpu_custom_call.1} parent=1 // pred_check_branch
      %49 = sbr.rel (0) target = $region21
    $region20: #{tpu_custom_call.1} parent=1 // pred_region
      %51 = vsyncadd [#allocation4], 0
      %s53 = sshll.u32 [#allocation7], 4
      %s54 = int_to_ptr.vmem [resolvable:$true] %s53
      %s55 = sshll.u32 %s2, 4
      %s56 = int_to_ptr.hbm [resolvable:$true] %s55
      %58 = dma.vmem_to_hbm [thread:$0]  %s54, 128, %s56, [#allocation4]
    $region21: #{tpu_custom_call.1} parent=1 // pred_fallthru
      _
    // Predicated region
    $region22: #{tpu_custom_call.1} parent=1 // pred_check
      _
    $region23: #{tpu_custom_call.1} parent=1 // pred_check_branch
      %60 = sbr.rel (0) target = $region25
    $region24: #{tpu_custom_call.1} parent=1 // pred_region
      %62 = dma.done [#allocation4], 128
    $region25: #{tpu_custom_call.1} parent=1 // pred_fallthru
      _
    %63 = vsyncpa [#allocation3], 1
    %64 = vsyncpa [#allocation6], 1
    %65 = vsyncpa [#allocation4], 1

</llo_original>
